<compile_context>
chip_gen: v6e
topology: v6e:2x2x1
jax: 0.10.0
libtpu: 0.0.40
codegen_flags: <defaults>
</compile_context>

<pallas_src>
import jax
import jax.numpy as jnp
from jax.experimental import pallas as pl
from jax.experimental.pallas import tpu as pltpu


def _reduce_state_kernel(h_ref, c_ref, h_out_ref, c_out_ref):
    # Block is (D, tn).  Reduce over D (the sublane axis) inside the block.
    # dtype=jnp.float32 makes the sum accumulate in f32 without materializing
    # an upcast copy of the whole block (no-op for f32 inputs).
    h_out_ref[...] = jnp.sum(
        h_ref[...], axis=0, keepdims=True, dtype=jnp.float32
    ).astype(h_out_ref.dtype)
    c_out_ref[...] = jnp.sum(
        c_ref[...], axis=0, keepdims=True, dtype=jnp.float32
    ).astype(c_out_ref.dtype)


def reduce_state(
    h,
    c,
    *,
    vmem_budget_bytes=16 * 1024 * 1024,   # safe under v5e's 16 MiB scoped default
    min_pallas_bytes=4 * 1024 * 1024,     # below this, let XLA fuse a plain sum
    force_pallas=False,
):
    """Sum h and c over axis 0 with keepdim (LSTM-state reduce).

    h, c: (D, B, H) arrays of the same shape/dtype.
    Returns (h_reduced, c_reduced), each of shape (1, B, H).
    """
    assert h.shape == c.shape and h.dtype == c.dtype
    D, B, H = h.shape
    N = B * H
    itemsize = jnp.dtype(h.dtype).itemsize

    total_in_bytes = 2 * D * N * itemsize
    if not force_pallas and total_in_bytes < min_pallas_bytes:
        # Fusion path: a standalone pallas_call (~1-3us dispatch) costs more
        # than the whole reduction at typical LSTM-state sizes.
        return (
            jnp.sum(h, axis=0, keepdims=True),
            jnp.sum(c, axis=0, keepdims=True),
        )

    # Lane-dense layout: flatten (B, H) -> N on the last (lane) axis so output
    # stores are full-width vst instead of masked partial stores.
    h2 = h.reshape(D, N)
    c2 = c.reshape(D, N)

    out_shape = jax.ShapeDtypeStruct((1, N), h.dtype)
    cost = pl.CostEstimate(
        flops=2 * D * N,
        transcendentals=0,
        bytes_accessed=2 * (D * N + N) * itemsize,
    )

    # Whole-problem VMEM footprint if kept resident with NO pipelining:
    # two (D, N) inputs + two (1, N) outputs, single-buffered.
    single_block_bytes = 2 * (D * N + N) * itemsize

    if single_block_bytes <= vmem_budget_bytes:
        # Single-block path: no grid, whole arrays resident in VMEM, no
        # double-buffering (there is nothing to overlap with).
        full_vmem = pl.BlockSpec(memory_space=pltpu.MemorySpace.VMEM)
        h_red, c_red = pl.pallas_call(
            _reduce_state_kernel,
            out_shape=(out_shape, out_shape),
            in_specs=[full_vmem, full_vmem],
            out_specs=(full_vmem, full_vmem),
            cost_estimate=cost,
        )(h2, c2)
    else:
        # Tiled path: largest lane tile (multiple of 128) whose double-buffered
        # working set fits the VMEM budget.  The D-reduction stays entirely
        # inside each block, so the lane-tile grid axis is truly parallel
        # (shards across v7x's two TensorCores).  No input padding: the ragged
        # last block's OOB lanes only produce OOB output lanes, which Pallas
        # masks on store.
        bytes_per_lane = 2 * 2 * (D + 1) * itemsize  # 2 arrays x 2 bufs x (D in + 1 out)
        tn = max((vmem_budget_bytes // bytes_per_lane) // 128 * 128, 128)
        tn = min(tn, pl.cdiv(N, 128) * 128)
        grid = (pl.cdiv(N, tn),)

        in_spec = pl.BlockSpec((D, tn), lambda i: (0, i))
        out_spec = pl.BlockSpec((1, tn), lambda i: (0, i))

        h_red, c_red = pl.pallas_call(
            _reduce_state_kernel,
            out_shape=(out_shape, out_shape),
            grid_spec=pltpu.PrefetchScalarGridSpec(
                num_scalar_prefetch=0,
                grid=grid,
                in_specs=[in_spec, in_spec],
                out_specs=[out_spec, out_spec],
            ),
            compiler_params=pltpu.CompilerParams(
                dimension_semantics=("parallel",),
            ),
            cost_estimate=cost,
        )(h2, c2)

    return h_red.reshape(1, B, H), c_red.reshape(1, B, H)


if __name__ == "__main__":
    key = jax.random.PRNGKey(0)
    kh, kc, kh2, kc2 = jax.random.split(key, 4)

    # Small shapes consistent with an LSTM hidden state:
    # (num_dirs*layers=2, batch=8, hidden=32)
    D, B, H = 2, 8, 32
    h = jax.random.normal(kh, (D, B, H), dtype=jnp.float32)
    c = jax.random.normal(kc, (D, B, H), dtype=jnp.float32)

    h_ref = jnp.sum(h, axis=0, keepdims=True)
    c_ref = jnp.sum(c, axis=0, keepdims=True)

    # 1) Pallas single-block (no-grid, VMEM-resident) path.
    h_red, c_red = reduce_state(h, c, force_pallas=True)
    jax.block_until_ready((h_red, c_red))
    assert h_red.shape == (1, B, H) and c_red.shape == (1, B, H)
    assert jnp.allclose(h_red, h_ref, atol=1e-6, rtol=1e-6)
    assert jnp.allclose(c_red, c_ref, atol=1e-6, rtol=1e-6)

    # 2) Auto path at this (tiny) size takes the fused jnp.sum route.
    h_auto, c_auto = reduce_state(h, c)
    jax.block_until_ready((h_auto, c_auto))
    assert jnp.allclose(h_auto, h_ref, atol=1e-6, rtol=1e-6)
    assert jnp.allclose(c_auto, c_ref, atol=1e-6, rtol=1e-6)

    # 3) Tiled parallel path (forced via a tiny VMEM budget), including a
    #    ragged last lane-block with no input padding.
    D2, B2, H2 = 4, 16, 8192
    hb = jax.random.normal(kh2, (D2, B2, H2), dtype=jnp.float32)
    cb = jax.random.normal(kc2, (D2, B2, H2), dtype=jnp.float32)
    hb_red, cb_red = reduce_state(
        hb, cb, force_pallas=True, vmem_budget_bytes=2 * 1024 * 1024
    )
    jax.block_until_ready((hb_red, cb_red))
    assert jnp.allclose(hb_red, jnp.sum(hb, axis=0, keepdims=True), atol=1e-5, rtol=1e-5)
    assert jnp.allclose(cb_red, jnp.sum(cb, axis=0, keepdims=True), atol=1e-5, rtol=1e-5)

    print("KERNEL_OK")
</pallas_src>

<mosaic_0001>
module attributes {stable_mosaic.version = 11 : i64} {
  func.func @_reduce_state_kernel(%arg0: memref<2x256xf32, #tpu.memory_space<vmem>>, %arg1: memref<2x256xf32, #tpu.memory_space<vmem>>, %arg2: memref<1x256xf32, #tpu.memory_space<vmem>>, %arg3: memref<1x256xf32, #tpu.memory_space<vmem>>) attributes {dimension_semantics = [], scalar_prefetch = 0 : i64, scratch_operands = 0 : i64, tpu.core_type = #tpu.core_type<tc>} {
    %c0 = arith.constant 0 : index
    %c0_0 = arith.constant 0 : index
    %0 = vector.load %arg0[%c0, %c0_0] : memref<2x256xf32, #tpu.memory_space<vmem>>, vector<2x256xf32>
    %cst = arith.constant dense<0.000000e+00> : vector<256xf32>
    %1 = vector.multi_reduction <add>, %0, %cst [0] : vector<2x256xf32> to vector<256xf32>
    %2 = vector.shape_cast %1 : vector<256xf32> to vector<1x256xf32>
    %c0_1 = arith.constant 0 : index
    %c0_2 = arith.constant 0 : index
    %3 = vector.load %arg2[%c0_1, %c0_2] : memref<1x256xf32, #tpu.memory_space<vmem>>, vector<1x256xf32>
    tpu.vector_store %arg2[%c0_1, %c0_2], %2 {strides = array<i32>} : memref<1x256xf32, #tpu.memory_space<vmem>>, vector<1x256xf32>,
    %c0_3 = arith.constant 0 : index
    %c0_4 = arith.constant 0 : index
    %4 = vector.load %arg1[%c0_3, %c0_4] : memref<2x256xf32, #tpu.memory_space<vmem>>, vector<2x256xf32>
    %cst_5 = arith.constant dense<0.000000e+00> : vector<256xf32>
    %5 = vector.multi_reduction <add>, %4, %cst_5 [0] : vector<2x256xf32> to vector<256xf32>
    %6 = vector.shape_cast %5 : vector<256xf32> to vector<1x256xf32>
    %c0_6 = arith.constant 0 : index
    %c0_7 = arith.constant 0 : index
    %7 = vector.load %arg3[%c0_6, %c0_7] : memref<1x256xf32, #tpu.memory_space<vmem>>, vector<1x256xf32>
    tpu.vector_store %arg3[%c0_6, %c0_7], %6 {strides = array<i32>} : memref<1x256xf32, #tpu.memory_space<vmem>>, vector<1x256xf32>,
    return
  }
}

</mosaic_0001>

<llo_original>
// kernel: tpu_custom_call.1
$region0: #{tpu_custom_call.1}
  #allocation0 [shape = 'u32[]', space=smem, size = 0x4, offset = 0x4, fixed_abs, tag = 'smem constant byte address 0x4 - core index']
  #allocation1 [shape = 'u32[144,128]{1,0:T(1,128)}', space=vmem, size = 0x12000, scoped, tag = 'internal scratch']
  %s0 = inlined_call_operand.hbm [shape: f32[2,256], index: 0, kind: input, shape index: {}]
  %s1 = inlined_call_operand.hbm [shape: f32[2,256], index: 1, kind: input, shape index: {}]
  %s2 = inlined_call_operand.hbm [shape: f32[1,256], index: 2, kind: output, shape index: {0}]
  %s3 = inlined_call_operand.hbm [shape: f32[1,256], index: 3, kind: output, shape index: {1}]
  %4 = xla_tuple %s2, %s3
  %s5 = sld [smem:[#allocation0]]
  $region34: #{tpu_custom_call.1} parent=0
    _
  %s7 = ssub.s32 1, %s5
  %s8 = scalar_select 0, %s7, %s5
  $region1: #{tpu_custom_call.1} parent=0
    #allocation2 [shape = 'u8[2048]{0}', space=vmem, size = 0x800, scoped, tag = 'input window, operand 0, single buffered']
    #allocation3 [shape = 's32[1]{0}', space=sflag, size = 0x4, scoped, tag = 'scoped memory for tpu_custom_call.1']
    #allocation4 [shape = 's32[1]{0}', space=sflag, size = 0x4, scoped, tag = 'scoped memory for tpu_custom_call.1']
    #allocation5 [shape = 'u8[2048]{0}', space=vmem, size = 0x800, scoped, tag = 'input window, operand 1, single buffered']
    #allocation6 [shape = 's32[1]{0}', space=sflag, size = 0x4, scoped, tag = 'scoped memory for tpu_custom_call.1']
    #allocation7 [shape = 'u8[1024]{0}', space=vmem, size = 0x400, scoped, tag = 'output window, operand 0, single buffered']
    #allocation8 [shape = 'u8[1024]{0}', space=vmem, size = 0x400, scoped, tag = 'output window, operand 1, single buffered']
    #allocation9 [shape = 's32[1]{0}', space=sflag, size = 0x4, scoped, tag = 'scoped memory for tpu_custom_call.1']
    %9 = vsyncpa [#allocation3], 0
    %10 = vsyncpa [#allocation6], 0
    %11 = vsyncpa [#allocation4], 0
    %12 = vsyncpa [#allocation9], 0
    // Predicated region
    $region2: #{tpu_custom_call.1} parent=1 // pred_check
      _
    $region3: #{tpu_custom_call.1} parent=1 // pred_check_branch
      %14 = sbr.rel (0) target = $region5
    $region4: #{tpu_custom_call.1} parent=1 // pred_region
      %s16 = ssub.s32 64, 64
      %17 = vsyncadd [#allocation3], %s16
      %s19 = sshll.u32 [#allocation2], 4
      %s20 = int_to_ptr.vmem [resolvable:$true] %s19
      %22 = dma.hbm_to_vmem [thread:$0]  %s0, 64, %s20, [#allocation3]
    $region5: #{tpu_custom_call.1} parent=1 // pred_fallthru
      _
    // Predicated region
    $region6: #{tpu_custom_call.1} parent=1 // pred_check
      _
    $region7: #{tpu_custom_call.1} parent=1 // pred_check_branch
      %24 = sbr.rel (0) target = $region9
    $region8: #{tpu_custom_call.1} parent=1 // pred_region
      %s26 = ssub.s32 64, 64
      %27 = vsyncadd [#allocation6], %s26
      %s29 = sshll.u32 [#allocation5], 4
      %s30 = int_to_ptr.vmem [resolvable:$true] %s29
      %32 = dma.hbm_to_vmem [thread:$0]  %s1, 64, %s30, [#allocation6]
    $region9: #{tpu_custom_call.1} parent=1 // pred_fallthru
      _
    // Predicated region
    $region10: #{tpu_custom_call.1} parent=1 // pred_check
      _
    $region11: #{tpu_custom_call.1} parent=1 // pred_check_branch
      %34 = sbr.rel (0) target = $region13
    $region12: #{tpu_custom_call.1} parent=1 // pred_region
      %35 = dma.done [#allocation3], 64
    $region13: #{tpu_custom_call.1} parent=1 // pred_fallthru
      _
    // Predicated region
    $region14: #{tpu_custom_call.1} parent=1 // pred_check
      _
    $region15: #{tpu_custom_call.1} parent=1 // pred_check_branch
      %37 = sbr.rel (0) target = $region17
    $region16: #{tpu_custom_call.1} parent=1 // pred_region
      %38 = dma.done [#allocation6], 64
    $region17: #{tpu_custom_call.1} parent=1 // pred_fallthru
      _
    %v39 = vld [vmem:[#allocation2] sm:$0xf]
    %v42 = vunpack.c.l.s4 1983009808
    %v43 = vunpack.c.0.s8 %v42
    %v44 = vlaneseq
    %v45 = vshrl.u32 %v44, 7
    %v46 = vsub.s32 %v43, %v45
    %v47 = vrot.slane %v39, %v46
    %v48 = vcombine.high %v47, %v47
    %vm51 = vcmask 1041408
    %v52 = vsel %vm51, %v47, 0.0
    %v53 = vrot.slane %v52, 4
    %v54 = vadd.f32 %v52, %v53
    %v55 = vrot.slane %v54, 2
    %v56 = vadd.f32 %v54, %v55
    %v57 = vrot.slane %v56, 1
    %v58 = vadd.f32 %v56, %v57
    %v59 = vsel %vm51, %v48, 0.0
    %v60 = vrot.slane %v59, 4
    %v61 = vadd.f32 %v59, %v60
    %v62 = vrot.slane %v61, 2
    %v63 = vadd.f32 %v61, %v62
    %v64 = vrot.slane %v63, 1
    %v65 = vadd.f32 %v63, %v64
    %v68 = vcombine.low %v58, %v65
    %v70 = vunpack.c.l.s4 1966171168
    %v71 = vunpack.c.0.s8 %v70
    %v72 = vlaneseq
    %v73 = vshrl.u32 %v72, 7
    %v74 = vsub.s32 %v71, %v73
    %v75 = vrot.slane %v68, %v74
    %v77 = vunpack.c.l.s4 1966171168
    %v78 = vunpack.c.0.s8 %v77
    %v79 = vlaneseq
    %v80 = vshrl.u32 %v79, 7
    %v81 = vsub.s32 %v78, %v80
    %v82 = vrot.slane %v75, %v81
    %v84 = vlaneseq
    %vm85 = vcmp.ge.s32.totalorder %v84, 0
    %vm86 = vcmp.lt.s32.totalorder %v84, 256
    %vm87 = vmand %vm85, %vm86
    %88 = vst.msk [vmem:[#allocation7] sm:$0x3] %vm87, %v82
    %v89 = vld [vmem:[#allocation5] sm:$0xf]
    %v92 = vunpack.c.l.s4 1983009808
    %v93 = vunpack.c.0.s8 %v92
    %v94 = vlaneseq
    %v95 = vshrl.u32 %v94, 7
    %v96 = vsub.s32 %v93, %v95
    %v97 = vrot.slane %v89, %v96
    %v98 = vcombine.high %v97, %v97
    %v101 = vsel %vm51, %v97, 0.0
    %v102 = vrot.slane %v101, 4
    %v103 = vadd.f32 %v101, %v102
    %v104 = vrot.slane %v103, 2
    %v105 = vadd.f32 %v103, %v104
    %v106 = vrot.slane %v105, 1
    %v107 = vadd.f32 %v105, %v106
    %v108 = vsel %vm51, %v98, 0.0
    %v109 = vrot.slane %v108, 4
    %v110 = vadd.f32 %v108, %v109
    %v111 = vrot.slane %v110, 2
    %v112 = vadd.f32 %v110, %v111
    %v113 = vrot.slane %v112, 1
    %v114 = vadd.f32 %v112, %v113
    %v117 = vcombine.low %v107, %v114
    %v119 = vunpack.c.l.s4 1966171168
    %v120 = vunpack.c.0.s8 %v119
    %v121 = vlaneseq
    %v122 = vshrl.u32 %v121, 7
    %v123 = vsub.s32 %v120, %v122
    %v124 = vrot.slane %v117, %v123
    %v126 = vunpack.c.l.s4 1966171168
    %v127 = vunpack.c.0.s8 %v126
    %v128 = vlaneseq
    %v129 = vshrl.u32 %v128, 7
    %v130 = vsub.s32 %v127, %v129
    %v131 = vrot.slane %v124, %v130
    %133 = vst.msk [vmem:[#allocation8] sm:$0x3] %vm87, %v131
    // Predicated region
    $region18: #{tpu_custom_call.1} parent=1 // pred_check
      _
    $region19: #{tpu_custom_call.1} parent=1 // pred_check_branch
      %135 = sbr.rel (0) target = $region21
    $region20: #{tpu_custom_call.1} parent=1 // pred_region
      %s137 = ssub.s32 32, 32
      %138 = vsyncadd [#allocation4], %s137
      %s140 = sshll.u32 [#allocation7], 4
      %s141 = int_to_ptr.vmem [resolvable:$true] %s140
      %143 = dma.vmem_to_hbm [thread:$0]  %s141, 32, %s2, [#allocation4]
    $region21: #{tpu_custom_call.1} parent=1 // pred_fallthru
      _
    // Predicated region
    $region22: #{tpu_custom_call.1} parent=1 // pred_check
      _
    $region23: #{tpu_custom_call.1} parent=1 // pred_check_branch
      %145 = sbr.rel (0) target = $region25
    $region24: #{tpu_custom_call.1} parent=1 // pred_region
      %s147 = ssub.s32 32, 32
      %148 = vsyncadd [#allocation9], %s147
      %s150 = sshll.u32 [#allocation8], 4
      %s151 = int_to_ptr.vmem [resolvable:$true] %s150
      %153 = dma.vmem_to_hbm [thread:$0]  %s151, 32, %s3, [#allocation9]
    $region25: #{tpu_custom_call.1} parent=1 // pred_fallthru
      _
    // Predicated region
    $region26: #{tpu_custom_call.1} parent=1 // pred_check
      _
    $region27: #{tpu_custom_call.1} parent=1 // pred_check_branch
      %155 = sbr.rel (0) target = $region29
    $region28: #{tpu_custom_call.1} parent=1 // pred_region
      %156 = dma.done [#allocation4], 32
    $region29: #{tpu_custom_call.1} parent=1 // pred_fallthru
      _
    // Predicated region
    $region30: #{tpu_custom_call.1} parent=1 // pred_check
      _
    $region31: #{tpu_custom_call.1} parent=1 // pred_check_branch
      %158 = sbr.rel (0) target = $region33
    $region32: #{tpu_custom_call.1} parent=1 // pred_region
      %159 = dma.done [#allocation9], 32
    $region33: #{tpu_custom_call.1} parent=1 // pred_fallthru
      _
    %160 = vsyncpa [#allocation3], 1
    %161 = vsyncpa [#allocation6], 1
    %162 = vsyncpa [#allocation4], 1
    %163 = vsyncpa [#allocation9], 1

</llo_original>
